<compile_context>
chip_gen: v7x
topology: tpu7x:2x2x1
jax: 0.10.0
libtpu: 0.0.40
codegen_flags: <defaults>
</compile_context>

<pallas_src>
import functools

import jax
import jax.numpy as jnp
from jax.experimental import pallas as pl
from jax.experimental.pallas import tpu as pltpu

BN_EPS = 1e-5
LANE = 128                 # pad feature dims to the 128-lane width (no more)
SUBLANE = 16               # bf16 sublane granularity for batch tiles
MAX_BLOCK_BATCH = 1024     # upper bound on the batch tile (rows)


def _round_up(n, m):
    return ((n + m - 1) // m) * m


def _vmem_limit_bytes():
    """Scoped-VMEM request sized to the actual chip (v5e/v6e 128 MiB, v7x 64 MiB)."""
    try:
        cap = int(pltpu.get_tpu_info().vmem_capacity_bytes)
    except Exception:
        cap = 64 * 1024 * 1024          # conservative fallback, safe on every gen
    return min(96 * 1024 * 1024, (cap * 3) // 4)


def _pick_batch_tiling(batch, cap, g=SUBLANE):
    """Pick (tile_rows, padded_batch).

    Minimizes streamed/padded rows plus a small per-grid-step overhead, with a
    penalty for single-step grids (a 1-step grid idles the 2nd TensorCore on
    v7x even with dimension_semantics=("parallel",)).  Avoids the old
    round_up(batch, tb) blow-up (e.g. batch=600, tb=512 -> 1024 rows)."""
    cap = max(g, min(cap, _round_up(batch, g)))
    best = None
    for tb in range(g, cap + 1, g):
        padded = _round_up(batch, tb)
        steps = padded // tb
        cost = padded + 4 * steps + (64 if steps == 1 else 0)
        if best is None or cost < best[0] or (cost == best[0] and tb > best[1]):
            best = (cost, tb, padded)
    _, tb, padded = best
    return tb, padded


def subnet_kernel(x_ref, w1_ref, b1_ref, w2_ref, b2_ref, w3_ref, b3_ref, out_ref):
    # BatchNorm is already folded into (w1, b1) in the wrapper; Dropout is the
    # identity (inference path).
    # TODO(synk): training-mode dropout (random mask + 1/(1-p) scaling) omitted.

    # Linear 1 + ReLU   (bf16 MXU operands, f32 accumulate, bf16 hand-off)
    y1 = jnp.dot(x_ref[...], w1_ref[...], preferred_element_type=jnp.float32)
    y1 = jnp.maximum(y1 + b1_ref[...], 0.0).astype(jnp.bfloat16)

    # Linear 2 + ReLU
    y2 = jnp.dot(y1, w2_ref[...], preferred_element_type=jnp.float32)
    y2 = jnp.maximum(y2 + b2_ref[...], 0.0).astype(jnp.bfloat16)

    # Linear 3 + ReLU
    y3 = jnp.dot(y2, w3_ref[...], preferred_element_type=jnp.float32)
    y3 = jnp.maximum(y3 + b3_ref[...], 0.0)

    out_ref[...] = y3.astype(out_ref.dtype)     # bf16, lane-dense store


@functools.partial(jax.jit, static_argnames=("hidden_size", "block_batch"))
def subnet_forward(x, params, *, hidden_size, block_batch=MAX_BLOCK_BATCH):
    """x: (batch, in_size) float32.  Returns (batch, hidden_size) bfloat16."""
    batch, in_size = x.shape
    in_pad, hid_pad = params["w1"].shape

    # ---- BatchNorm1d batch statistics: one fused pass over x (f32) ----
    s1 = jnp.sum(x, axis=0)
    s2 = jnp.sum(x * x, axis=0)
    mean = s1 / batch
    var = jnp.maximum(s2 / batch - mean * mean, 0.0)            # biased variance
    scale = params["gamma"][0] * jax.lax.rsqrt(var + BN_EPS)    # (in_size,)
    shift = params["beta"][0] - mean * scale                    # (in_size,)

    # ---- Fold the BN affine into the first Linear (tiny, once per call) ----
    scale_p = jnp.pad(scale, (0, in_pad - in_size))
    shift_p = jnp.pad(shift, (0, in_pad - in_size))
    w1_f32 = params["w1"].astype(jnp.float32)
    w1f = (scale_p[:, None] * w1_f32).astype(jnp.bfloat16)      # (in_pad, hid_pad)
    b1f = params["b1"] + shift_p[None, :] @ w1_f32              # (1, hid_pad) f32

    # ---- VMEM budget & batch tiling ----
    resident_bytes = (2 * (in_pad * hid_pad + 2 * hid_pad * hid_pad)  # bf16 weights
                      + 3 * hid_pad * 4)                              # f32 biases
    single_buffer_weights = resident_bytes > (8 << 20)   # big weights (v7x fit)
    weight_bufs = 1 if single_buffer_weights else 2

    vmem_limit = _vmem_limit_bytes()
    budget = vmem_limit - weight_bufs * resident_bytes - (4 << 20)    # headroom
    # per-row VMEM: double-buffered bf16 x/out tiles + f32/bf16 intermediates
    per_row_bytes = 2 * 2 * (in_pad + hid_pad) + 8 * hid_pad
    vmem_rows = max(SUBLANE, (budget // per_row_bytes) // SUBLANE * SUBLANE)
    tb, batch_pad = _pick_batch_tiling(batch, min(block_batch, vmem_rows))

    # ---- Pad + cast x to bf16 in one shot (half the streamed bytes) ----
    if (batch_pad, in_pad) != (batch, in_size):
        x_b = jnp.pad(x, ((0, batch_pad - batch),
                          (0, in_pad - in_size))).astype(jnp.bfloat16)
    else:
        x_b = x.astype(jnp.bfloat16)

    grid = (batch_pad // tb,)

    def const_spec(shape):
        # Resident block (same index every grid step).  Single-buffer when the
        # weights are large so double-buffering doesn't blow v7x's 64 MiB VMEM.
        if single_buffer_weights:
            return pl.BlockSpec(shape, lambda i: (0, 0),
                                pipeline_mode=pl.Buffered(1))
        return pl.BlockSpec(shape, lambda i: (0, 0))

    x_spec = pl.BlockSpec((tb, in_pad), lambda i: (i, 0))
    out_spec = pl.BlockSpec((tb, hid_pad), lambda i: (i, 0))
    w1_spec = const_spec((in_pad, hid_pad))
    w_spec = const_spec((hid_pad, hid_pad))
    b_spec = const_spec((1, hid_pad))

    flops = 2 * batch_pad * (in_pad * hid_pad + 2 * hid_pad * hid_pad)
    bytes_accessed = (batch_pad * (in_pad + hid_pad) * 2       # bf16 x in, y out
                      + (in_pad + 2 * hid_pad) * hid_pad * 2   # bf16 weights
                      + 3 * hid_pad * 4)                       # f32 biases
    cost = pl.CostEstimate(flops=flops, transcendentals=0,
                           bytes_accessed=bytes_accessed)

    out_full = pl.pallas_call(
        subnet_kernel,
        out_shape=jax.ShapeDtypeStruct((batch_pad, hid_pad), jnp.bfloat16),
        grid=grid,
        in_specs=[x_spec,                      # x tile (pipelined, bf16)
                  w1_spec, b_spec,             # BN-folded w1, b1 (resident)
                  w_spec, b_spec,              # w2, b2
                  w_spec, b_spec],             # w3, b3
        out_specs=out_spec,
        compiler_params=pltpu.CompilerParams(
            dimension_semantics=("parallel",),  # megacore sharding on v7x
            vmem_limit_bytes=vmem_limit),
        cost_estimate=cost,
    )(x_b, w1f, b1f,
      params["w2"], params["b2"],
      params["w3"], params["b3"])

    return out_full[:batch, :hidden_size]


def init_subnet_params(key, in_size, hidden_size):
    """Parameters matching the PyTorch module, pre-padded to lane width.

    Linear weights are stored transposed (in_features, out_features), zero
    padded to (in_pad, hid_pad), bf16 for the MXU.  Biases and BN affine
    params stay f32."""
    in_pad = _round_up(in_size, LANE)
    hid_pad = _round_up(hidden_size, LANE)
    k1, k2, k3, kb1, kb2, kb3 = jax.random.split(key, 6)

    def xavier(k, fan_in, fan_out):
        std = (2.0 / (fan_in + fan_out)) ** 0.5
        return std * jax.random.normal(k, (fan_in, fan_out), dtype=jnp.float32)

    def pad2(a, rows, cols):
        return jnp.pad(a, ((0, rows - a.shape[0]), (0, cols - a.shape[1])))

    return {
        # BatchNorm1d affine parameters (default init), real (unpadded) width.
        "gamma": jnp.ones((1, in_size), dtype=jnp.float32),
        "beta": jnp.zeros((1, in_size), dtype=jnp.float32),
        # Linear layers: transposed, zero-padded, bf16 weights; f32 biases.
        "w1": pad2(xavier(k1, in_size, hidden_size), in_pad, hid_pad).astype(jnp.bfloat16),
        "b1": pad2(0.01 * jax.random.normal(kb1, (1, hidden_size), dtype=jnp.float32), 1, hid_pad),
        "w2": pad2(xavier(k2, hidden_size, hidden_size), hid_pad, hid_pad).astype(jnp.bfloat16),
        "b2": pad2(0.01 * jax.random.normal(kb2, (1, hidden_size), dtype=jnp.float32), 1, hid_pad),
        "w3": pad2(xavier(k3, hidden_size, hidden_size), hid_pad, hid_pad).astype(jnp.bfloat16),
        "b3": pad2(0.01 * jax.random.normal(kb3, (1, hidden_size), dtype=jnp.float32), 1, hid_pad),
    }


def subnet_ref(x, params, hidden_size):
    """Pure-JAX reference mirroring the kernel's numerics (BN folded, bf16 I/O)."""
    batch, in_size = x.shape
    in_pad, hid_pad = params["w1"].shape
    mean = jnp.sum(x, axis=0) / batch
    var = jnp.maximum(jnp.sum(x * x, axis=0) / batch - mean * mean, 0.0)
    scale = params["gamma"][0] * jax.lax.rsqrt(var + BN_EPS)
    shift = params["beta"][0] - mean * scale
    scale_p = jnp.pad(scale, (0, in_pad - in_size))
    shift_p = jnp.pad(shift, (0, in_pad - in_size))
    w1_f32 = params["w1"].astype(jnp.float32)
    w1f = (scale_p[:, None] * w1_f32).astype(jnp.bfloat16)
    b1f = params["b1"] + shift_p[None, :] @ w1_f32
    xb = jnp.pad(x, ((0, 0), (0, in_pad - in_size))).astype(jnp.bfloat16)
    y1 = jnp.maximum(jnp.dot(xb, w1f, preferred_element_type=jnp.float32) + b1f,
                     0.0).astype(jnp.bfloat16)
    y2 = jnp.maximum(jnp.dot(y1, params["w2"], preferred_element_type=jnp.float32)
                     + params["b2"], 0.0).astype(jnp.bfloat16)
    y3 = jnp.maximum(jnp.dot(y2, params["w3"], preferred_element_type=jnp.float32)
                     + params["b3"], 0.0)
    return y3[:, :hidden_size].astype(jnp.bfloat16)


if __name__ == "__main__":
    batch, in_size, hidden_size = 8, 16, 32
    key = jax.random.PRNGKey(0)
    kx, kp = jax.random.split(key)

    x = jax.random.normal(kx, (batch, in_size), dtype=jnp.float32)
    params = init_subnet_params(kp, in_size, hidden_size)

    out = subnet_forward(x, params, hidden_size=hidden_size)
    out = jax.block_until_ready(out)

    ref = subnet_ref(x, params, hidden_size)
    assert out.shape == (batch, hidden_size)
    assert jnp.allclose(out.astype(jnp.float32), ref.astype(jnp.float32),
                        atol=2e-2, rtol=2e-2), "mismatch vs reference"

    print("KERNEL_OK")
</pallas_src>

<mosaic_0001>
module attributes {stable_mosaic.version = 11 : i64} {
  func.func @subnet_kernel(%arg0: i32, %arg1: memref<16x128xbf16, #tpu.memory_space<vmem>>, %arg2: memref<128x128xbf16, #tpu.memory_space<vmem>>, %arg3: memref<1x128xf32, #tpu.memory_space<vmem>>, %arg4: memref<128x128xbf16, #tpu.memory_space<vmem>>, %arg5: memref<1x128xf32, #tpu.memory_space<vmem>>, %arg6: memref<128x128xbf16, #tpu.memory_space<vmem>>, %arg7: memref<1x128xf32, #tpu.memory_space<vmem>>, %arg8: memref<16x128xbf16, #tpu.memory_space<vmem>>) attributes {dimension_semantics = [#tpu.dimension_semantics<parallel>], iteration_bounds = array<i64: 1>, scalar_prefetch = 0 : i64, scratch_operands = 0 : i64, tpu.core_type = #tpu.core_type<tc>, window_params = [{transform_indices = @transform_0, window_bounds = array<i64: 16, 128>}, {pipeline_mode = #tpu.pipeline_mode<synchronous>, transform_indices = @transform_1, window_bounds = array<i64: 128, 128>}, {pipeline_mode = #tpu.pipeline_mode<synchronous>, transform_indices = @transform_2, window_bounds = array<i64: 1, 128>}, {pipeline_mode = #tpu.pipeline_mode<synchronous>, transform_indices = @transform_3, window_bounds = array<i64: 128, 128>}, {pipeline_mode = #tpu.pipeline_mode<synchronous>, transform_indices = @transform_4, window_bounds = array<i64: 1, 128>}, {pipeline_mode = #tpu.pipeline_mode<synchronous>, transform_indices = @transform_5, window_bounds = array<i64: 128, 128>}, {pipeline_mode = #tpu.pipeline_mode<synchronous>, transform_indices = @transform_6, window_bounds = array<i64: 1, 128>}, {transform_indices = @transform_7, window_bounds = array<i64: 16, 128>}]} {
    %c0 = arith.constant 0 : index
    %c0_0 = arith.constant 0 : index
    %0 = vector.load %arg1[%c0, %c0_0] : memref<16x128xbf16, #tpu.memory_space<vmem>>, vector<16x128xbf16>
    %c0_1 = arith.constant 0 : index
    %c0_2 = arith.constant 0 : index
    %1 = vector.load %arg2[%c0_1, %c0_2] : memref<128x128xbf16, #tpu.memory_space<vmem>>, vector<128x128xbf16>
    %cst = arith.constant dense<0.000000e+00> : vector<16x128xf32>
    %2 = tpu.matmul %0, %1, %cst {dimension_numbers = #tpu.dot_dimension_numbers<[1], [0], [0], [1], [0, 0, 1, 1], [], []>} : vector<16x128xbf16>, vector<128x128xbf16>, vector<16x128xf32> -> vector<16x128xf32>
    %c0_3 = arith.constant 0 : index
    %c0_4 = arith.constant 0 : index
    %3 = vector.load %arg3[%c0_3, %c0_4] : memref<1x128xf32, #tpu.memory_space<vmem>>, vector<1x128xf32>
    %4 = vector.broadcast %3 : vector<1x128xf32> to vector<16x128xf32>
    %5 = arith.addf %2, %4 : vector<16x128xf32>
    %cst_5 = arith.constant 0.000000e+00 : f32
    %6 = vector.broadcast %cst_5 : f32 to vector<16x128xf32>
    %7 = arith.maximumf %5, %6 : vector<16x128xf32>
    %8 = arith.truncf %7 : vector<16x128xf32> to vector<16x128xbf16>
    %c0_6 = arith.constant 0 : index
    %c0_7 = arith.constant 0 : index
    %9 = vector.load %arg4[%c0_6, %c0_7] : memref<128x128xbf16, #tpu.memory_space<vmem>>, vector<128x128xbf16>
    %cst_8 = arith.constant dense<0.000000e+00> : vector<16x128xf32>
    %10 = tpu.matmul %8, %9, %cst_8 {dimension_numbers = #tpu.dot_dimension_numbers<[1], [0], [0], [1], [0, 0, 1, 1], [], []>} : vector<16x128xbf16>, vector<128x128xbf16>, vector<16x128xf32> -> vector<16x128xf32>
    %c0_9 = arith.constant 0 : index
    %c0_10 = arith.constant 0 : index
    %11 = vector.load %arg5[%c0_9, %c0_10] : memref<1x128xf32, #tpu.memory_space<vmem>>, vector<1x128xf32>
    %12 = vector.broadcast %11 : vector<1x128xf32> to vector<16x128xf32>
    %13 = arith.addf %10, %12 : vector<16x128xf32>
    %cst_11 = arith.constant 0.000000e+00 : f32
    %14 = vector.broadcast %cst_11 : f32 to vector<16x128xf32>
    %15 = arith.maximumf %13, %14 : vector<16x128xf32>
    %16 = arith.truncf %15 : vector<16x128xf32> to vector<16x128xbf16>
    %c0_12 = arith.constant 0 : index
    %c0_13 = arith.constant 0 : index
    %17 = vector.load %arg6[%c0_12, %c0_13] : memref<128x128xbf16, #tpu.memory_space<vmem>>, vector<128x128xbf16>
    %cst_14 = arith.constant dense<0.000000e+00> : vector<16x128xf32>
    %18 = tpu.matmul %16, %17, %cst_14 {dimension_numbers = #tpu.dot_dimension_numbers<[1], [0], [0], [1], [0, 0, 1, 1], [], []>} : vector<16x128xbf16>, vector<128x128xbf16>, vector<16x128xf32> -> vector<16x128xf32>
    %c0_15 = arith.constant 0 : index
    %c0_16 = arith.constant 0 : index
    %19 = vector.load %arg7[%c0_15, %c0_16] : memref<1x128xf32, #tpu.memory_space<vmem>>, vector<1x128xf32>
    %20 = vector.broadcast %19 : vector<1x128xf32> to vector<16x128xf32>
    %21 = arith.addf %18, %20 : vector<16x128xf32>
    %cst_17 = arith.constant 0.000000e+00 : f32
    %22 = vector.broadcast %cst_17 : f32 to vector<16x128xf32>
    %23 = arith.maximumf %21, %22 : vector<16x128xf32>
    %24 = arith.truncf %23 : vector<16x128xf32> to vector<16x128xbf16>
    %c0_18 = arith.constant 0 : index
    %c0_19 = arith.constant 0 : index
    %25 = vector.load %arg8[%c0_18, %c0_19] : memref<16x128xbf16, #tpu.memory_space<vmem>>, vector<16x128xbf16>
    tpu.vector_store %arg8[%c0_18, %c0_19], %24 {strides = array<i32>} : memref<16x128xbf16, #tpu.memory_space<vmem>>, vector<16x128xbf16>,
    return
  }
  func.func @transform_0(%arg0: i32) -> (i32, i32) {
    %c0_i32 = arith.constant 0 : i32
    %c0_i32_0 = arith.constant 0 : i32
    return %arg0, %c0_i32 : i32, i32
  }
  func.func @transform_1(%arg0: i32) -> (i32, i32) {
    %c0_i32 = arith.constant 0 : i32
    %c0_i32_0 = arith.constant 0 : i32
    %c0_i32_1 = arith.constant 0 : i32
    return %c0_i32, %c0_i32_0 : i32, i32
  }
  func.func @transform_2(%arg0: i32) -> (i32, i32) {
    %c0_i32 = arith.constant 0 : i32
    %c0_i32_0 = arith.constant 0 : i32
    %c0_i32_1 = arith.constant 0 : i32
    return %c0_i32, %c0_i32_0 : i32, i32
  }
  func.func @transform_3(%arg0: i32) -> (i32, i32) {
    %c0_i32 = arith.constant 0 : i32
    %c0_i32_0 = arith.constant 0 : i32
    %c0_i32_1 = arith.constant 0 : i32
    return %c0_i32, %c0_i32_0 : i32, i32
  }
  func.func @transform_4(%arg0: i32) -> (i32, i32) {
    %c0_i32 = arith.constant 0 : i32
    %c0_i32_0 = arith.constant 0 : i32
    %c0_i32_1 = arith.constant 0 : i32
    return %c0_i32, %c0_i32_0 : i32, i32
  }
  func.func @transform_5(%arg0: i32) -> (i32, i32) {
    %c0_i32 = arith.constant 0 : i32
    %c0_i32_0 = arith.constant 0 : i32
    %c0_i32_1 = arith.constant 0 : i32
    return %c0_i32, %c0_i32_0 : i32, i32
  }
  func.func @transform_6(%arg0: i32) -> (i32, i32) {
    %c0_i32 = arith.constant 0 : i32
    %c0_i32_0 = arith.constant 0 : i32
    %c0_i32_1 = arith.constant 0 : i32
    return %c0_i32, %c0_i32_0 : i32, i32
  }
  func.func @transform_7(%arg0: i32) -> (i32, i32) {
    %c0_i32 = arith.constant 0 : i32
    %c0_i32_0 = arith.constant 0 : i32
    return %arg0, %c0_i32 : i32, i32
  }
}

</mosaic_0001>

<llo_original>
// kernel: subnet_forward.1
$region0: #{subnet_forward.1}
  #allocation0 [shape = 'u32[]', space=smem, size = 0x4, offset = 0x4, fixed_abs, tag = 'smem constant byte address 0x4 - core index']
  #allocation1 [shape = 'u32[144,128]{1,0:T(1,128)}', space=vmem, size = 0x12000, scoped, tag = 'internal scratch']
  %s0 = inlined_call_operand.vmem [shape: bf16[16,128], index: 0, kind: input, shape index: {}]
  %s1 = inlined_call_operand.vmem [shape: bf16[128,128], index: 1, kind: input, shape index: {}]
  %s2 = inlined_call_operand.vmem [shape: f32[1,128], index: 2, kind: input, shape index: {}]
  %s3 = inlined_call_operand.vmem [shape: bf16[128,128], index: 3, kind: input, shape index: {}]
  %s4 = inlined_call_operand.vmem [shape: f32[1,128], index: 4, kind: input, shape index: {}]
  %s5 = inlined_call_operand.vmem [shape: bf16[128,128], index: 5, kind: input, shape index: {}]
  %s6 = inlined_call_operand.vmem [shape: f32[1,128], index: 6, kind: input, shape index: {}]
  %s7 = inlined_call_operand.vmem [shape: bf16[16,128], index: 7, kind: output, shape index: {}]
  %s8 = sld [smem:[#allocation0]]
  $region38: #{subnet_forward.1} parent=0
    _
  %s10 = ssub.s32 1, %s8
  %s11 = scalar_select 0, %s10, %s8
  // Predicated region
  $region2: #{subnet_forward.1} parent=0 // pred_check
    _
  $region3: #{subnet_forward.1} parent=0 // pred_check_branch
    %13 = sbr.rel (0) target = $region5
  $region4: #{subnet_forward.1} parent=0 // pred_region
    _
  $region5: #{subnet_forward.1} parent=0 // pred_fallthru
    _
  // Predicated region
  $region6: #{subnet_forward.1} parent=0 // pred_check
    _
  $region7: #{subnet_forward.1} parent=0 // pred_check_branch
    %15 = sbr.rel (0) target = $region9
  $region8: #{subnet_forward.1} parent=0 // pred_region
    _
  $region9: #{subnet_forward.1} parent=0 // pred_fallthru
    _
  // Predicated region
  $region10: #{subnet_forward.1} parent=0 // pred_check
    _
  $region11: #{subnet_forward.1} parent=0 // pred_check_branch
    %17 = sbr.rel (0) target = $region13
  $region12: #{subnet_forward.1} parent=0 // pred_region
    _
  $region13: #{subnet_forward.1} parent=0 // pred_fallthru
    _
  // Predicated region
  $region14: #{subnet_forward.1} parent=0 // pred_check
    _
  $region15: #{subnet_forward.1} parent=0 // pred_check_branch
    %19 = sbr.rel (0) target = $region17
  $region16: #{subnet_forward.1} parent=0 // pred_region
    _
  $region17: #{subnet_forward.1} parent=0 // pred_fallthru
    _
  // Predicated region
  $region18: #{subnet_forward.1} parent=0 // pred_check
    _
  $region19: #{subnet_forward.1} parent=0 // pred_check_branch
    %21 = sbr.rel (0) target = $region21
  $region20: #{subnet_forward.1} parent=0 // pred_region
    _
  $region21: #{subnet_forward.1} parent=0 // pred_fallthru
    _
  // Predicated region
  $region22: #{subnet_forward.1} parent=0 // pred_check
    _
  $region23: #{subnet_forward.1} parent=0 // pred_check_branch
    %23 = sbr.rel (0) target = $region25
  $region24: #{subnet_forward.1} parent=0 // pred_region
    _
  $region25: #{subnet_forward.1} parent=0 // pred_fallthru
    _
  // Predicated region
  $region26: #{subnet_forward.1} parent=0 // pred_check
    _
  $region27: #{subnet_forward.1} parent=0 // pred_check_branch
    %25 = sbr.rel (0) target = $region29
  $region28: #{subnet_forward.1} parent=0 // pred_region
    _
  $region29: #{subnet_forward.1} parent=0 // pred_fallthru
    _
  %v27 = vld [vmem:[%s0] sm:$0xf]
  %v28 = vld [vmem:[%s0 + $0x4] sm:$0xf]
  %v29 = vld [vmem:[%s1] sm:$0xf]
  %v30 = vld [vmem:[%s1 + $0x4] sm:$0xf]
  %v31 = vld [vmem:[%s1 + $0x8] sm:$0xf]
  %v32 = vld [vmem:[%s1 + $0xc] sm:$0xf]
  %v33 = vld [vmem:[%s1 + $0x10] sm:$0xf]
  %v34 = vld [vmem:[%s1 + $0x14] sm:$0xf]
  %v35 = vld [vmem:[%s1 + $0x18] sm:$0xf]
  %v36 = vld [vmem:[%s1 + $0x1c] sm:$0xf]
  %v37 = vld [vmem:[%s1 + $0x20] sm:$0xf]
  %v38 = vld [vmem:[%s1 + $0x24] sm:$0xf]
  %v39 = vld [vmem:[%s1 + $0x28] sm:$0xf]
  %v40 = vld [vmem:[%s1 + $0x2c] sm:$0xf]
  %v41 = vld [vmem:[%s1 + $0x30] sm:$0xf]
  %v42 = vld [vmem:[%s1 + $0x34] sm:$0xf]
  %v43 = vld [vmem:[%s1 + $0x38] sm:$0xf]
  %v44 = vld [vmem:[%s1 + $0x3c] sm:$0xf]
  %v45 = vld [vmem:[%s2] sm:$0x1]
  %v47 = vlaneseq
  %v48 = vshrl.u32 %v47, 7
  %v49 = vsub.s32 0, %v48
  %v50 = vrot.slane %v45, %v49
  %v54 = vunpack.c.l.b16 %v27
  %v55 = vunpack.c.l.b16 %v28
  %v56 = vpack.c.b16 %v55, %v54
  %v74 = vunpack.c.l.b16 %v29
  %v75 = vunpack.c.l.b16 %v30
  %v76 = vunpack.c.l.b16 %v31
  %v77 = vunpack.c.l.b16 %v32
  %v78 = vunpack.c.l.b16 %v33
  %v79 = vunpack.c.l.b16 %v34
  %v80 = vunpack.c.l.b16 %v35
  %v81 = vunpack.c.l.b16 %v36
  %v82 = vunpack.c.l.b16 %v37
  %v83 = vunpack.c.l.b16 %v38
  %v84 = vunpack.c.l.b16 %v39
  %v85 = vunpack.c.l.b16 %v40
  %v86 = vunpack.c.l.b16 %v41
  %v87 = vunpack.c.l.b16 %v42
  %v88 = vunpack.c.l.b16 %v43
  %v89 = vunpack.c.l.b16 %v44
  %v90 = vpack.c.b16 %v75, %v74
  %v91 = vpack.c.b16 %v77, %v76
  %v92 = vpack.c.b16 %v79, %v78
  %v93 = vpack.c.b16 %v81, %v80
  %v94 = vpack.c.b16 %v83, %v82
  %v95 = vpack.c.b16 %v85, %v84
  %v96 = vpack.c.b16 %v87, %v86
  %v97 = vpack.c.b16 %v89, %v88
  %106 = vmatprep.subr.bf16.mxu0 0
  %107 = vmatpush1.bf16.msra.mxu0 %v90
  %108 = vmatprep.subr.bf16.mxu0 0
  %109 = vmatpush1.bf16.msra.mxu0 %v91
  %110 = vmatprep.subr.bf16.mxu0 0
  %111 = vmatpush1.bf16.msra.mxu0 %v92
  %112 = vmatprep.subr.bf16.mxu0 0
  %113 = vmatpush1.bf16.msra.mxu0 %v93
  %114 = vmatprep.subr.bf16.mxu0 0
  %115 = vmatpush1.bf16.msra.mxu0 %v94
  %116 = vmatprep.subr.bf16.mxu0 0
  %117 = vmatpush1.bf16.msra.mxu0 %v95
  %118 = vmatprep.subr.bf16.mxu0 0
  %119 = vmatpush1.bf16.msra.mxu0 %v96
  %120 = vmatprep.subr.bf16.mxu0 0
  %121 = vmatpush1.bf16.msra.mxu0 %v97
  %122 = vmatprep.subr.bf16.mxu0 0
  %123 = vmatpush1.bf16.msra.mxu0 0
  %124 = vmatprep.subr.bf16.mxu0 0
  %125 = vmatpush1.bf16.msra.mxu0 0
  %126 = vmatprep.subr.bf16.mxu0 0
  %127 = vmatpush1.bf16.msra.mxu0 0
  %128 = vmatprep.subr.bf16.mxu0 0
  %129 = vmatpush1.bf16.msra.mxu0 0
  %130 = vmatprep.subr.bf16.mxu0 0
  %131 = vmatpush1.bf16.msra.mxu0 0
  %132 = vmatprep.subr.bf16.mxu0 0
  %133 = vmatpush1.bf16.msra.mxu0 0
  %134 = vmatprep.subr.bf16.mxu0 0
  %135 = vmatpush1.bf16.msra.mxu0 0
  %136 = vmatprep.subr.bf16.mxu0 0
  %137 = vmatpush1.bf16.msra.mxu0 0
  %138 = vmatprep.mubr.bf16.mxu0 0
  %139 = vmatmul.mubr.bf16.gmra.mrb[0].mxu0 %v56
  %v140 = vpop.f32.mrb[0].mxu0
  %v141 = vadd.f32 %v50, %v140
  %v142 = vpop.f32.mrb[0].mxu0
  %v143 = vpop.f32.mrb[0].mxu0
  %v144 = vadd.f32 %v50, %v143
  %v145 = vpop.f32.mrb[0].mxu0
  %146 = vdwg.mxu0
  %v147 = vmax.f32 %v141, 0.0
  %v148 = vmax.f32 %v144, 0.0
  %v149 = vpack.c.bf16 %v148, %v147
  %v150 = vld [vmem:[%s3] sm:$0xf]
  %v151 = vld [vmem:[%s3 + $0x4] sm:$0xf]
  %v152 = vld [vmem:[%s3 + $0x8] sm:$0xf]
  %v153 = vld [vmem:[%s3 + $0xc] sm:$0xf]
  %v154 = vld [vmem:[%s3 + $0x10] sm:$0xf]
  %v155 = vld [vmem:[%s3 + $0x14] sm:$0xf]
  %v156 = vld [vmem:[%s3 + $0x18] sm:$0xf]
  %v157 = vld [vmem:[%s3 + $0x1c] sm:$0xf]
  %v158 = vld [vmem:[%s3 + $0x20] sm:$0xf]
  %v159 = vld [vmem:[%s3 + $0x24] sm:$0xf]
  %v160 = vld [vmem:[%s3 + $0x28] sm:$0xf]
  %v161 = vld [vmem:[%s3 + $0x2c] sm:$0xf]
  %v162 = vld [vmem:[%s3 + $0x30] sm:$0xf]
  %v163 = vld [vmem:[%s3 + $0x34] sm:$0xf]
  %v164 = vld [vmem:[%s3 + $0x38] sm:$0xf]
  %v165 = vld [vmem:[%s3 + $0x3c] sm:$0xf]
  %v166 = vld [vmem:[%s4] sm:$0x1]
  %v168 = vlaneseq
  %v169 = vshrl.u32 %v168, 7
  %v170 = vsub.s32 0, %v169
  %v171 = vrot.slane %v166, %v170
  %v189 = vunpack.c.l.b16 %v150
  %v190 = vunpack.c.l.b16 %v151
  %v191 = vunpack.c.l.b16 %v152
  %v192 = vunpack.c.l.b16 %v153
  %v193 = vunpack.c.l.b16 %v154
  %v194 = vunpack.c.l.b16 %v155
  %v195 = vunpack.c.l.b16 %v156
  %v196 = vunpack.c.l.b16 %v157
  %v197 = vunpack.c.l.b16 %v158
  %v198 = vunpack.c.l.b16 %v159
  %v199 = vunpack.c.l.b16 %v160
  %v200 = vunpack.c.l.b16 %v161
  %v201 = vunpack.c.l.b16 %v162
  %v202 = vunpack.c.l.b16 %v163
  %v203 = vunpack.c.l.b16 %v164
  %v204 = vunpack.c.l.b16 %v165
  %v205 = vpack.c.b16 %v190, %v189
  %v206 = vpack.c.b16 %v192, %v191
  %v207 = vpack.c.b16 %v194, %v193
  %v208 = vpack.c.b16 %v196, %v195
  %v209 = vpack.c.b16 %v198, %v197
  %v210 = vpack.c.b16 %v200, %v199
  %v211 = vpack.c.b16 %v202, %v201
  %v212 = vpack.c.b16 %v204, %v203
  %221 = vmatprep.subr.bf16.mxu0 0
  %222 = vmatpush1.bf16.msra.mxu0 %v205
  %223 = vmatprep.subr.bf16.mxu0 0
  %224 = vmatpush1.bf16.msra.mxu0 %v206
  %225 = vmatprep.subr.bf16.mxu0 0
  %226 = vmatpush1.bf16.msra.mxu0 %v207
  %227 = vmatprep.subr.bf16.mxu0 0
  %228 = vmatpush1.bf16.msra.mxu0 %v208
  %229 = vmatprep.subr.bf16.mxu0 0
  %230 = vmatpush1.bf16.msra.mxu0 %v209
  %231 = vmatprep.subr.bf16.mxu0 0
  %232 = vmatpush1.bf16.msra.mxu0 %v210
  %233 = vmatprep.subr.bf16.mxu0 0
  %234 = vmatpush1.bf16.msra.mxu0 %v211
  %235 = vmatprep.subr.bf16.mxu0 0
  %236 = vmatpush1.bf16.msra.mxu0 %v212
  %237 = vmatprep.subr.bf16.mxu0 0
  %238 = vmatpush1.bf16.msra.mxu0 0
  %239 = vmatprep.subr.bf16.mxu0 0
  %240 = vmatpush1.bf16.msra.mxu0 0
  %241 = vmatprep.subr.bf16.mxu0 0
  %242 = vmatpush1.bf16.msra.mxu0 0
  %243 = vmatprep.subr.bf16.mxu0 0
  %244 = vmatpush1.bf16.msra.mxu0 0
  %245 = vmatprep.subr.bf16.mxu0 0
  %246 = vmatpush1.bf16.msra.mxu0 0
  %247 = vmatprep.subr.bf16.mxu0 0
  %248 = vmatpush1.bf16.msra.mxu0 0
  %249 = vmatprep.subr.bf16.mxu0 0
  %250 = vmatpush1.bf16.msra.mxu0 0
  %251 = vmatprep.subr.bf16.mxu0 0
  %252 = vmatpush1.bf16.msra.mxu0 0
  %253 = vmatprep.mubr.bf16.mxu0 0
  %254 = vmatmul.mubr.bf16.gmra.mrb[0].mxu0 %v149
  %v255 = vpop.f32.mrb[0].mxu0
  %v256 = vadd.f32 %v171, %v255
  %v257 = vpop.f32.mrb[0].mxu0
  %v258 = vpop.f32.mrb[0].mxu0
  %v259 = vadd.f32 %v171, %v258
  %v260 = vpop.f32.mrb[0].mxu0
  %261 = vdwg.mxu0
  %v262 = vmax.f32 %v256, 0.0
  %v263 = vmax.f32 %v259, 0.0
  %v264 = vpack.c.bf16 %v263, %v262
  %v265 = vld [vmem:[%s5] sm:$0xf]
  %v266 = vld [vmem:[%s5 + $0x4] sm:$0xf]
  %v267 = vld [vmem:[%s5 + $0x8] sm:$0xf]
  %v268 = vld [vmem:[%s5 + $0xc] sm:$0xf]
  %v269 = vld [vmem:[%s5 + $0x10] sm:$0xf]
  %v270 = vld [vmem:[%s5 + $0x14] sm:$0xf]
  %v271 = vld [vmem:[%s5 + $0x18] sm:$0xf]
  %v272 = vld [vmem:[%s5 + $0x1c] sm:$0xf]
  %v273 = vld [vmem:[%s5 + $0x20] sm:$0xf]
  %v274 = vld [vmem:[%s5 + $0x24] sm:$0xf]
  %v275 = vld [vmem:[%s5 + $0x28] sm:$0xf]
  %v276 = vld [vmem:[%s5 + $0x2c] sm:$0xf]
  %v277 = vld [vmem:[%s5 + $0x30] sm:$0xf]
  %v278 = vld [vmem:[%s5 + $0x34] sm:$0xf]
  %v279 = vld [vmem:[%s5 + $0x38] sm:$0xf]
  %v280 = vld [vmem:[%s5 + $0x3c] sm:$0xf]
  %v281 = vld [vmem:[%s6] sm:$0x1]
  %v283 = vlaneseq
  %v284 = vshrl.u32 %v283, 7
  %v285 = vsub.s32 0, %v284
  %v286 = vrot.slane %v281, %v285
  %v304 = vunpack.c.l.b16 %v265
  %v305 = vunpack.c.l.b16 %v266
  %v306 = vunpack.c.l.b16 %v267
  %v307 = vunpack.c.l.b16 %v268
  %v308 = vunpack.c.l.b16 %v269
  %v309 = vunpack.c.l.b16 %v270
  %v310 = vunpack.c.l.b16 %v271
  %v311 = vunpack.c.l.b16 %v272
  %v312 = vunpack.c.l.b16 %v273
  %v313 = vunpack.c.l.b16 %v274
  %v314 = vunpack.c.l.b16 %v275
  %v315 = vunpack.c.l.b16 %v276
  %v316 = vunpack.c.l.b16 %v277
  %v317 = vunpack.c.l.b16 %v278
  %v318 = vunpack.c.l.b16 %v279
  %v319 = vunpack.c.l.b16 %v280
  %v320 = vpack.c.b16 %v305, %v304
  %v321 = vpack.c.b16 %v307, %v306
  %v322 = vpack.c.b16 %v309, %v308
  %v323 = vpack.c.b16 %v311, %v310
  %v324 = vpack.c.b16 %v313, %v312
  %v325 = vpack.c.b16 %v315, %v314
  %v326 = vpack.c.b16 %v317, %v316
  %v327 = vpack.c.b16 %v319, %v318
  %336 = vmatprep.subr.bf16.mxu0 0
  %337 = vmatpush1.bf16.msra.mxu0 %v320
  %338 = vmatprep.subr.bf16.mxu0 0
  %339 = vmatpush1.bf16.msra.mxu0 %v321
  %340 = vmatprep.subr.bf16.mxu0 0
  %341 = vmatpush1.bf16.msra.mxu0 %v322
  %342 = vmatprep.subr.bf16.mxu0 0
  %343 = vmatpush1.bf16.msra.mxu0 %v323
  %344 = vmatprep.subr.bf16.mxu0 0
  %345 = vmatpush1.bf16.msra.mxu0 %v324
  %346 = vmatprep.subr.bf16.mxu0 0
  %347 = vmatpush1.bf16.msra.mxu0 %v325
  %348 = vmatprep.subr.bf16.mxu0 0
  %349 = vmatpush1.bf16.msra.mxu0 %v326
  %350 = vmatprep.subr.bf16.mxu0 0
  %351 = vmatpush1.bf16.msra.mxu0 %v327
  %352 = vmatprep.subr.bf16.mxu0 0
  %353 = vmatpush1.bf16.msra.mxu0 0
  %354 = vmatprep.subr.bf16.mxu0 0
  %355 = vmatpush1.bf16.msra.mxu0 0
  %356 = vmatprep.subr.bf16.mxu0 0
  %357 = vmatpush1.bf16.msra.mxu0 0
  %358 = vmatprep.subr.bf16.mxu0 0
  %359 = vmatpush1.bf16.msra.mxu0 0
  %360 = vmatprep.subr.bf16.mxu0 0
  %361 = vmatpush1.bf16.msra.mxu0 0
  %362 = vmatprep.subr.bf16.mxu0 0
  %363 = vmatpush1.bf16.msra.mxu0 0
  %364 = vmatprep.subr.bf16.mxu0 0
  %365 = vmatpush1.bf16.msra.mxu0 0
  %366 = vmatprep.subr.bf16.mxu0 0
  %367 = vmatpush1.bf16.msra.mxu0 0
  %368 = vmatprep.mubr.bf16.mxu0 0
  %369 = vmatmul.mubr.bf16.gmra.mrb[0].mxu0 %v264
  %v370 = vpop.f32.mrb[0].mxu0
  %v371 = vadd.f32 %v286, %v370
  %v372 = vpop.f32.mrb[0].mxu0
  %v373 = vpop.f32.mrb[0].mxu0
  %v374 = vadd.f32 %v286, %v373
  %v375 = vpop.f32.mrb[0].mxu0
  %376 = vdwg.mxu0
  %v377 = vmax.f32 %v371, 0.0
  %v378 = vmax.f32 %v374, 0.0
  %v379 = vpack.c.bf16 %v378, %v377
  %v381 = vunpack.c.l.b16 %v379
  %v382 = vunpack.c.h.b16 %v379
  %v383 = vpack.c.b16 %v381, %v381
  %v384 = vpack.c.b16 %v382, %v382
  %387 = vst [vmem:[%s7] sm:$0xf] %v383
  %388 = vst [vmem:[%s7 + $0x4] sm:$0xf] %v384
  // Predicated region
  $region30: #{subnet_forward.1} parent=0 // pred_check
    _
  $region31: #{subnet_forward.1} parent=0 // pred_check_branch
    %390 = sbr.rel (0) target = $region33
  $region32: #{subnet_forward.1} parent=0 // pred_region
    _
  $region33: #{subnet_forward.1} parent=0 // pred_fallthru
    _
  // Predicated region
  $region34: #{subnet_forward.1} parent=0 // pred_check
    _
  $region35: #{subnet_forward.1} parent=0 // pred_check_branch
    %392 = sbr.rel (0) target = $region37
  $region36: #{subnet_forward.1} parent=0 // pred_region
    _
  $region37: #{subnet_forward.1} parent=0 // pred_fallthru
    _

</llo_original>
